<compile_context>
chip_gen: v7x
topology: tpu7x:2x2x1
jax: 0.10.0
libtpu: 0.0.40
codegen_flags: <defaults>
</compile_context>

<pallas_src>
import jax
import jax.numpy as jnp
from jax.experimental import pallas as pl
from jax.experimental.pallas import tpu as pltpu


def _embedding_gather_kernel(idx_ref, table_hbm, out_ref, sem):
    # idx_ref:   SMEM int32[B]  -- token indices
    # table_hbm: HBM  f32[V, D] -- full table, left in HBM (no auto-DMA)
    # out_ref:   VMEM f32[B, D] -- gathered rows
    # sem:       DMA completion semaphore
    V = table_hbm.shape[0]
    B = out_ref.shape[0]

    # TODO(synk): for large B, double-buffer the row DMAs (start i+1 before
    # waiting on i) to overlap latency; with B=1 in this module it is moot.
    @pl.loop(0, B)
    def _(i):
        # Clamp index to a valid row: OOB DMAs/slices are not safely guarded.
        idx = jnp.minimum(jnp.maximum(idx_ref[i], 0), V - 1)
        cp = pltpu.make_async_copy(
            table_hbm.at[pl.ds(idx, 1), :],   # one (1, D) row, ~D*4 bytes of HBM traffic
            out_ref.at[pl.ds(i, 1), :],
            sem,
        )
        cp.start()
        cp.wait()


def embedding_lookup(table: jax.Array, indices: jax.Array) -> jax.Array:
    """Gather rows `indices` (shape (B,)) from `table` (shape (V, D)).

    Equivalent to nn.Embedding(table)(LongTensor(indices)) -> (B, D).
    The table stays in HBM; only the selected rows are DMA'd.
    """
    V, D = table.shape
    indices = jnp.asarray(indices, dtype=jnp.int32).reshape(-1)
    B = indices.shape[0]
    return pl.pallas_call(
        _embedding_gather_kernel,
        out_shape=jax.ShapeDtypeStruct((B, D), table.dtype),
        in_specs=[
            pl.BlockSpec(memory_space=pltpu.MemorySpace.SMEM),  # indices (scalars)
            pl.BlockSpec(memory_space=pl.ANY),                  # table stays in HBM
        ],
        out_specs=pl.BlockSpec(memory_space=pltpu.MemorySpace.VMEM),
        scratch_shapes=[pltpu.SemaphoreType.DMA(())],
    )(indices, table)


class SimpleEmbeddingPallas:
    """Mirrors the PyTorch SimpleEmbedding module's __init__/forward semantics."""

    def __init__(self, enum_word: dict, wdims: int, key: jax.Array):
        vocab_size = len(enum_word) + 3
        # Deterministic init matching nn.Embedding's default N(0, 1).
        self.weight = jax.random.normal(key, (vocab_size, wdims), dtype=jnp.float32)
        self.vocab = {word: ind + 3 for word, ind in enum_word.items()}
        self.vocab['*PAD*'] = 1
        self.vocab['*INITIAL*'] = 2

    def forward(self):
        entry_norm = '*root*'
        index = jnp.asarray([int(self.vocab.get(entry_norm, 0))], dtype=jnp.int32)
        wordvec = embedding_lookup(self.weight, index)   # (1, wdims)
        return wordvec


if __name__ == "__main__":
    key = jax.random.PRNGKey(0)

    # Small synthetic word enumeration (includes '*root*' so the lookup hits a
    # real row: index = enum_word['*root*'] + 3).
    enum_word = {'*root*': 0, 'the': 1, 'cat': 2, 'sat': 3, 'mat': 4}
    wdims = 128  # multiple of 128 -> lane-dense output

    model = SimpleEmbeddingPallas(enum_word, wdims, key)

    # Module forward: single '*root*' lookup -> (1, wdims).
    wordvec = jax.block_until_ready(model.forward())
    expected_idx = model.vocab['*root*']
    ref = model.weight[expected_idx][None, :]
    assert wordvec.shape == (1, wdims)
    assert wordvec.dtype == jnp.float32
    assert bool(jnp.allclose(wordvec, ref)), "Pallas single lookup mismatch vs reference"

    # Batched path through the same kernel (one pallas_call, row-only DMAs).
    idx_batch = jnp.asarray(
        [model.vocab['the'], model.vocab['*PAD*'],
         model.vocab['mat'], model.vocab['*INITIAL*']],
        dtype=jnp.int32,
    )
    batch_vecs = jax.block_until_ready(embedding_lookup(model.weight, idx_batch))
    ref_batch = model.weight[idx_batch]
    assert batch_vecs.shape == (4, wdims)
    assert bool(jnp.allclose(batch_vecs, ref_batch)), "Pallas batched lookup mismatch vs reference"

    print("KERNEL_OK")
</pallas_src>

<mosaic_0001>
module attributes {stable_mosaic.version = 11 : i64} {
  func.func @_embedding_gather_kernel(%arg0: memref<1xi32, #tpu.memory_space<smem>>, %arg1: memref<8x128xf32, #tpu.memory_space<any>>, %arg2: memref<1x128xf32, #tpu.memory_space<vmem>>, %arg3: memref<!tpu.dma_semaphore, #tpu.memory_space<semaphore_mem>>) attributes {dimension_semantics = [], scalar_prefetch = 0 : i64, scratch_operands = 1 : i64, tpu.core_type = #tpu.core_type<tc>} {
    %c0_i32 = arith.constant 0 : i32
    %c1_i32 = arith.constant 1 : i32
    %0 = arith.muli %c0_i32, %c1_i32 : i32
    %c0_i32_0 = arith.constant 0 : i32
    %1 = arith.addi %c0_i32_0, %0 : i32
    %2 = arith.index_cast %1 : i32 to index
    %3 = memref.load %arg0[%2] : memref<1xi32, #tpu.memory_space<smem>>
    %c0_i32_1 = arith.constant 0 : i32
    %4 = arith.maxsi %3, %c0_i32_1 : i32
    %c7_i32 = arith.constant 7 : i32
    %5 = arith.minsi %4, %c7_i32 : i32
    %c0_i32_2 = arith.constant 0 : i32
    %6 = tpu.memref_slice %arg1[%5, %c0_i32_2] : memref<8x128xf32, #tpu.memory_space<any>> -> memref<1x128xf32, #tpu.memory_space<any>>
    %c0_i32_3 = arith.constant 0 : i32
    %7 = tpu.memref_slice %arg2[%1, %c0_i32_3] : memref<1x128xf32, #tpu.memory_space<vmem>> -> memref<1x128xf32, #tpu.memory_space<vmem>>
    tpu.enqueue_dma source(%6 : memref<1x128xf32, #tpu.memory_space<any>>) target(%7 : memref<1x128xf32, #tpu.memory_space<vmem>>) target_semaphore(%arg3 : memref<!tpu.dma_semaphore, #tpu.memory_space<semaphore_mem>>)
    %c0_i32_4 = arith.constant 0 : i32
    %8 = tpu.memref_slice %arg1[%5, %c0_i32_4] : memref<8x128xf32, #tpu.memory_space<any>> -> memref<1x128xf32, #tpu.memory_space<any>>
    %c0_i32_5 = arith.constant 0 : i32
    %9 = tpu.memref_slice %arg2[%1, %c0_i32_5] : memref<1x128xf32, #tpu.memory_space<vmem>> -> memref<1x128xf32, #tpu.memory_space<vmem>>
    tpu.wait_dma2 semaphore(%arg3 : memref<!tpu.dma_semaphore, #tpu.memory_space<semaphore_mem>>) src(%8 : memref<1x128xf32, #tpu.memory_space<any>>) dst(%9 : memref<1x128xf32, #tpu.memory_space<vmem>>)
    %c1_i32_6 = arith.constant 1 : i32
    return
  }
}

</mosaic_0001>

<llo_original>
// kernel: tpu_custom_call.1
$region0: #{tpu_custom_call.1}
  #allocation0 [shape = 'u32[]', space=smem, size = 0x4, offset = 0x4, fixed_abs, tag = 'smem constant byte address 0x4 - core index']
  #allocation1 [shape = 'u32[144,128]{1,0:T(1,128)}', space=vmem, size = 0x12000, scoped, tag = 'internal scratch']
  #allocation2 [shape = 's32[1]{0}', space=sflag, size = 0x4, scoped, tag = 'scratch operand']
  #allocation3 [shape = 's32[1]{0:T(128)S(6)}', space=smem, size = 0x200, scoped, tag = 'scoped memory for tpu_custom_call.1']
  #allocation6 [shape = 's32[]', space=sflag, size = 0x4, offset = 0, fixed_abs, tag = 'sflag constant byte address 0x0 - dummy sync flag']
  #allocation7 [shape = 's32[]', space=sflag, size = 0x4, offset = 0, fixed_abs, tag = 'sflag constant byte address 0x0 - dummy sync flag']
  #allocation8 [shape = 'u32[]', space=smem, size = 0x4, offset = 0x44, fixed_abs, tag = 'smem constant byte address 0x44 - assertion arg 0']
  #allocation9 [shape = 'u32[]', space=smem, size = 0x4, offset = 0x48, fixed_abs, tag = 'smem constant byte address 0x48 - assertion arg 1']
  %s0 = inlined_call_operand.<no memory space> [shape: s32[1], index: 0, kind: input, shape index: {}]
  %s1 = inlined_call_operand.hbm [shape: f32[8,128], index: 1, kind: input, shape index: {}]
  %s2 = inlined_call_operand.hbm [shape: f32[1,128], index: 2, kind: output, shape index: {}]
  %s3 = sld [smem:[#allocation0]]
  $region18: #{tpu_custom_call.1} parent=0
    _
  %s5 = ssub.s32 1, %s3
  %s6 = scalar_select 0, %s5, %s3
  %7 = sst [smem:[#allocation3]] %s0
  $region1: #{tpu_custom_call.1} parent=0
    #allocation4 [shape = 'u8[512]{0}', space=vmem, size = 0x400, scoped, tag = 'output window, operand 0, single buffered']
    #allocation5 [shape = 's32[1]{0}', space=sflag, size = 0x4, scoped, tag = 'scoped memory for tpu_custom_call.1']
    %8 = vsyncpa [#allocation5], 0
    // Predicated region
    $region2: #{tpu_custom_call.1} parent=1 // pred_check
      _
    $region3: #{tpu_custom_call.1} parent=1 // pred_check_branch
      %10 = sbr.rel (0) target = $region5
    $region4: #{tpu_custom_call.1} parent=1 // pred_region
      _
    $region5: #{tpu_custom_call.1} parent=1 // pred_fallthru
      _
    %s11 = sld [smem:[#allocation3]]
    %p12 = scmp.gt.s32.totalorder %s11, 0
    %s13 = scalar_select %p12, %s11, 0
    %p14 = scmp.lt.s32.totalorder %s13, 7
    %s15 = scalar_select %p14, %s13, 7
    %s16 = smul.addr %s15, 16
    %s17 = scalar_lea.hbm %s1, %s16
    // Predicated region
    $region6: #{tpu_custom_call.1} parent=1 // pred_check
      _
    $region7: #{tpu_custom_call.1} parent=1 // pred_check_branch
      %19 = sbr.rel target = $region9
    $region8: #{tpu_custom_call.1} parent=1 // pred_region
      %20 = sst [smem:[#allocation8]] [#allocation7]
      %21 = sst [smem:[#allocation9]] [#allocation6]
    $region9: #{tpu_custom_call.1} parent=1 // pred_fallthru
      _
    %23 = shalt.err (0)
    %s25 = sshll.u32 [#allocation4], 4
    %s26 = int_to_ptr.vmem [resolvable:$true] %s25
    %28 = dma.hbm_to_vmem [thread:$0]  %s17, 16, %s26, [#allocation2]
    %s29 = smul.u32 1, 1
    %s30 = sshll.u32 %s29, 4
    %31 = dma.done [#allocation2], %s30
    // Predicated region
    $region10: #{tpu_custom_call.1} parent=1 // pred_check
      _
    $region11: #{tpu_custom_call.1} parent=1 // pred_check_branch
      %33 = sbr.rel (0) target = $region13
    $region12: #{tpu_custom_call.1} parent=1 // pred_region
      %s35 = ssub.s32 16, 16
      %36 = vsyncadd [#allocation5], %s35
      %s38 = sshll.u32 [#allocation4], 4
      %s39 = int_to_ptr.vmem [resolvable:$true] %s38
      %41 = dma.vmem_to_hbm [thread:$0]  %s39, 16, %s2, [#allocation5]
    $region13: #{tpu_custom_call.1} parent=1 // pred_fallthru
      _
    // Predicated region
    $region14: #{tpu_custom_call.1} parent=1 // pred_check
      _
    $region15: #{tpu_custom_call.1} parent=1 // pred_check_branch
      %43 = sbr.rel (0) target = $region17
    $region16: #{tpu_custom_call.1} parent=1 // pred_region
      %44 = dma.done [#allocation5], 16
    $region17: #{tpu_custom_call.1} parent=1 // pred_fallthru
      _
    %45 = vsyncpa [#allocation5], 1
  %46 = vsyncmov [#allocation2]
  %s47 = vpop.sfrf %46
  %p48 = scmp.eq.s32.totalorder %s47, 0
  %p49 = pneg %p48
  %51 = shalt.err (%p49)

</llo_original>
